<compile_context>
chip_gen: v7x
topology: tpu7x:2x2x1
jax: 0.10.0
libtpu: 0.0.40
codegen_flags: <defaults>
</compile_context>

<pallas_src>
import math

import jax
import jax.numpy as jnp
from jax import lax
from jax.experimental import pallas as pl
from jax.experimental.pallas import tpu as pltpu


def _channel_mlp_kernel(x_ref, w1_ref, b1_ref, w2_ref, b2_ref, o_ref, acc_ref):
    i = pl.program_id(1)

    @pl.when(i == 0)
    def _():
        # Initialise the accumulator with the second bias (broadcast over rows).
        acc_ref[...] = jnp.broadcast_to(
            b2_ref[...].astype(jnp.float32), acc_ref.shape)

    # dense1 partial (over this intermediate tile) + bias; f32 accumulation on MXU.
    h = jnp.dot(x_ref[...], w1_ref[...], preferred_element_type=jnp.float32)
    h = h + b1_ref[...].astype(jnp.float32)
    # SiLU: x * sigmoid(x).  exp lowers to the EUP slot; mul/add on the VPU.
    h = h * (1.0 / (1.0 + jnp.exp(-h)))
    # TODO(synk): dropout is identity in eval/inference; training-mode dropout would
    # use pltpu.prng_seed / pltpu.prng_random_bits here.

    # dense2 partial product, accumulated into f32 VMEM scratch.
    acc_ref[...] += jnp.dot(h.astype(w2_ref.dtype), w2_ref[...],
                            preferred_element_type=jnp.float32)

    @pl.when(i == pl.num_programs(1) - 1)
    def _():
        o_ref[...] = acc_ref[...].astype(o_ref.dtype)


def channel_mlp(x, w1, b1, w2, b2, *, tm=256, ti=512):
    """ChannelMLP forward: silu(x @ w1 + b1) @ w2 + b2  (dropout = identity).

    x:  (..., hidden)
    w1: (hidden, intermediate)   (== PyTorch dense1.weight.T)
    b1: (intermediate,)
    w2: (intermediate, hidden)   (== PyTorch dense2.weight.T)
    b2: (hidden,)
    """
    orig_shape = x.shape
    hidden = orig_shape[-1]
    inter = w1.shape[1]
    M = math.prod(orig_shape[:-1])
    x2 = x.reshape(M, hidden)

    # Pick the largest tile that divides the dim; otherwise use the full dim so the
    # (8,128) constraint is satisfied by "equals full array dims".
    TM = tm if (M % tm == 0) else M
    TI = ti if (inter % ti == 0) else inter
    grid = (M // TM, inter // TI)

    out = pl.pallas_call(
        _channel_mlp_kernel,
        out_shape=jax.ShapeDtypeStruct((M, hidden), x.dtype),
        grid_spec=pltpu.PrefetchScalarGridSpec(
            num_scalar_prefetch=0,
            grid=grid,
            in_specs=[
                pl.BlockSpec((TM, hidden), lambda m, i: (m, 0)),   # x rows
                pl.BlockSpec((hidden, TI), lambda m, i: (0, i)),   # W1 column tile
                pl.BlockSpec((1, TI), lambda m, i: (0, i)),        # b1 tile
                pl.BlockSpec((TI, hidden), lambda m, i: (i, 0)),   # W2 row tile
                pl.BlockSpec((1, hidden), lambda m, i: (0, 0)),    # b2 (whole)
            ],
            out_specs=pl.BlockSpec((TM, hidden), lambda m, i: (m, 0)),
            scratch_shapes=[pltpu.VMEM((TM, hidden), jnp.float32)],
        ),
        compiler_params=pltpu.CompilerParams(
            dimension_semantics=("parallel", "arbitrary"),
        ),
    )(x2, w1, b1.reshape(1, inter), w2, b2.reshape(1, hidden))

    return out.reshape(orig_shape)


def _reference(x, w1, b1, w2, b2):
    """Pure-JAX reference for the eval-mode ChannelMLP forward."""
    h = jnp.dot(x, w1, precision=lax.Precision.HIGHEST) + b1
    h = h * jax.nn.sigmoid(h)
    return jnp.dot(h, w2, precision=lax.Precision.HIGHEST) + b2


if __name__ == "__main__":
    key = jax.random.PRNGKey(0)
    B, S = 2, 8                 # batch, sequence
    hidden, intermediate = 32, 64

    k_x, k_w1, k_b1, k_w2, k_b2 = jax.random.split(key, 5)
    x = jax.random.normal(k_x, (B, S, hidden), dtype=jnp.float32)
    w1 = jax.random.normal(k_w1, (hidden, intermediate), dtype=jnp.float32) * 0.1
    b1 = jax.random.normal(k_b1, (intermediate,), dtype=jnp.float32) * 0.1
    w2 = jax.random.normal(k_w2, (intermediate, hidden), dtype=jnp.float32) * 0.1
    b2 = jax.random.normal(k_b2, (hidden,), dtype=jnp.float32) * 0.1

    out = channel_mlp(x, w1, b1, w2, b2)
    out = jax.block_until_ready(out)

    ref = _reference(x, w1, b1, w2, b2)
    assert out.shape == (B, S, hidden)
    assert jnp.allclose(out, ref, atol=1e-3, rtol=1e-3), "mismatch vs reference"

    print("KERNEL_OK")
</pallas_src>

<mosaic_0001>
module attributes {stable_mosaic.version = 11 : i64} {
  func.func @_channel_mlp_kernel(%arg0: i32, %arg1: i32, %arg2: memref<16x32xf32, #tpu.memory_space<vmem>>, %arg3: memref<32x64xf32, #tpu.memory_space<vmem>>, %arg4: memref<1x64xf32, #tpu.memory_space<vmem>>, %arg5: memref<64x32xf32, #tpu.memory_space<vmem>>, %arg6: memref<1x32xf32, #tpu.memory_space<vmem>>, %arg7: memref<16x32xf32, #tpu.memory_space<vmem>>, %arg8: memref<16x32xf32, #tpu.memory_space<vmem>>) attributes {dimension_semantics = [#tpu.dimension_semantics<parallel>, #tpu.dimension_semantics<arbitrary>], iteration_bounds = array<i64: 1, 1>, scalar_prefetch = 0 : i64, scratch_operands = 1 : i64, tpu.core_type = #tpu.core_type<tc>, window_params = [{transform_indices = @transform_0, window_bounds = array<i64: 16, 32>}, {transform_indices = @transform_1, window_bounds = array<i64: 32, 64>}, {transform_indices = @transform_2, window_bounds = array<i64: 1, 64>}, {transform_indices = @transform_3, window_bounds = array<i64: 64, 32>}, {pipeline_mode = #tpu.pipeline_mode<synchronous>, transform_indices = @transform_4, window_bounds = array<i64: 1, 32>}, {transform_indices = @transform_5, window_bounds = array<i64: 16, 32>}]} {
    %c0_i32 = arith.constant 0 : i32
    %0 = arith.cmpi eq, %arg1, %c0_i32 : i32
    %1 = arith.extui %0 : i1 to i32
    %c0_i32_0 = arith.constant 0 : i32
    %2 = arith.cmpi ne, %1, %c0_i32_0 : i32
    scf.if %2 {
      %c0_18 = arith.constant 0 : index
      %c0_19 = arith.constant 0 : index
      %25 = vector.load %arg6[%c0_18, %c0_19] : memref<1x32xf32, #tpu.memory_space<vmem>>, vector<1x32xf32>
      %26 = vector.shape_cast %25 : vector<1x32xf32> to vector<1x32xf32>
      %27 = vector.broadcast %26 : vector<1x32xf32> to vector<16x32xf32>
      %c0_20 = arith.constant 0 : index
      %c0_21 = arith.constant 0 : index
      %28 = vector.load %arg8[%c0_20, %c0_21] : memref<16x32xf32, #tpu.memory_space<vmem>>, vector<16x32xf32>
      tpu.vector_store %arg8[%c0_20, %c0_21], %27 {strides = array<i32>} : memref<16x32xf32, #tpu.memory_space<vmem>>, vector<16x32xf32>,
    } else {
    }
    %c0 = arith.constant 0 : index
    %c0_1 = arith.constant 0 : index
    %3 = vector.load %arg2[%c0, %c0_1] : memref<16x32xf32, #tpu.memory_space<vmem>>, vector<16x32xf32>
    %c0_2 = arith.constant 0 : index
    %c0_3 = arith.constant 0 : index
    %4 = vector.load %arg3[%c0_2, %c0_3] : memref<32x64xf32, #tpu.memory_space<vmem>>, vector<32x64xf32>
    %cst = arith.constant dense<0.000000e+00> : vector<16x64xf32>
    %5 = tpu.matmul %3, %4, %cst {dimension_numbers = #tpu.dot_dimension_numbers<[1], [0], [0], [1], [0, 0, 1, 1], [], []>} : vector<16x32xf32>, vector<32x64xf32>, vector<16x64xf32> -> vector<16x64xf32>
    %c0_4 = arith.constant 0 : index
    %c0_5 = arith.constant 0 : index
    %6 = vector.load %arg4[%c0_4, %c0_5] : memref<1x64xf32, #tpu.memory_space<vmem>>, vector<1x64xf32>
    %7 = vector.broadcast %6 : vector<1x64xf32> to vector<16x64xf32>
    %8 = arith.addf %5, %7 : vector<16x64xf32>
    %cst_6 = arith.constant 0.000000e+00 : f32
    %9 = vector.broadcast %cst_6 : f32 to vector<16x64xf32>
    %10 = arith.subf %9, %8 : vector<16x64xf32>
    %11 = math.exp %10 : vector<16x64xf32>
    %cst_7 = arith.constant 1.000000e+00 : f32
    %12 = vector.broadcast %cst_7 : f32 to vector<16x64xf32>
    %13 = arith.addf %12, %11 : vector<16x64xf32>
    %cst_8 = arith.constant 1.000000e+00 : f32
    %14 = vector.broadcast %cst_8 : f32 to vector<16x64xf32>
    %15 = arith.divf %14, %13 : vector<16x64xf32>
    %16 = arith.mulf %8, %15 : vector<16x64xf32>
    %c0_9 = arith.constant 0 : index
    %c0_10 = arith.constant 0 : index
    %17 = vector.load %arg8[%c0_9, %c0_10] : memref<16x32xf32, #tpu.memory_space<vmem>>, vector<16x32xf32>
    %c0_11 = arith.constant 0 : index
    %c0_12 = arith.constant 0 : index
    %18 = vector.load %arg5[%c0_11, %c0_12] : memref<64x32xf32, #tpu.memory_space<vmem>>, vector<64x32xf32>
    %cst_13 = arith.constant dense<0.000000e+00> : vector<16x32xf32>
    %19 = tpu.matmul %16, %18, %cst_13 {dimension_numbers = #tpu.dot_dimension_numbers<[1], [0], [0], [1], [0, 0, 1, 1], [], []>} : vector<16x64xf32>, vector<64x32xf32>, vector<16x32xf32> -> vector<16x32xf32>
    %20 = arith.addf %17, %19 : vector<16x32xf32>
    %c0_14 = arith.constant 0 : index
    %c0_15 = arith.constant 0 : index
    %21 = vector.load %arg8[%c0_14, %c0_15] : memref<16x32xf32, #tpu.memory_space<vmem>>, vector<16x32xf32>
    tpu.vector_store %arg8[%c0_14, %c0_15], %20 {strides = array<i32>} : memref<16x32xf32, #tpu.memory_space<vmem>>, vector<16x32xf32>,
    %c0_i32_16 = arith.constant 0 : i32
    %22 = arith.cmpi eq, %arg1, %c0_i32_16 : i32
    %23 = arith.extui %22 : i1 to i32
    %c0_i32_17 = arith.constant 0 : i32
    %24 = arith.cmpi ne, %23, %c0_i32_17 : i32
    scf.if %24 {
      %c0_18 = arith.constant 0 : index
      %c0_19 = arith.constant 0 : index
      %25 = vector.load %arg8[%c0_18, %c0_19] : memref<16x32xf32, #tpu.memory_space<vmem>>, vector<16x32xf32>
      %c0_20 = arith.constant 0 : index
      %c0_21 = arith.constant 0 : index
      %26 = vector.load %arg7[%c0_20, %c0_21] : memref<16x32xf32, #tpu.memory_space<vmem>>, vector<16x32xf32>
      tpu.vector_store %arg7[%c0_20, %c0_21], %25 {strides = array<i32>} : memref<16x32xf32, #tpu.memory_space<vmem>>, vector<16x32xf32>,
    } else {
    }
    return
  }
  func.func @transform_0(%arg0: i32, %arg1: i32) -> (i32, i32) {
    %c0_i32 = arith.constant 0 : i32
    %c0_i32_0 = arith.constant 0 : i32
    return %arg0, %c0_i32 : i32, i32
  }
  func.func @transform_1(%arg0: i32, %arg1: i32) -> (i32, i32) {
    %c0_i32 = arith.constant 0 : i32
    %c0_i32_0 = arith.constant 0 : i32
    return %c0_i32, %arg1 : i32, i32
  }
  func.func @transform_2(%arg0: i32, %arg1: i32) -> (i32, i32) {
    %c0_i32 = arith.constant 0 : i32
    %c0_i32_0 = arith.constant 0 : i32
    return %c0_i32, %arg1 : i32, i32
  }
  func.func @transform_3(%arg0: i32, %arg1: i32) -> (i32, i32) {
    %c0_i32 = arith.constant 0 : i32
    %c0_i32_0 = arith.constant 0 : i32
    return %arg1, %c0_i32 : i32, i32
  }
  func.func @transform_4(%arg0: i32, %arg1: i32) -> (i32, i32) {
    %c0_i32 = arith.constant 0 : i32
    %c0_i32_0 = arith.constant 0 : i32
    %c0_i32_1 = arith.constant 0 : i32
    return %c0_i32, %c0_i32_0 : i32, i32
  }
  func.func @transform_5(%arg0: i32, %arg1: i32) -> (i32, i32) {
    %c0_i32 = arith.constant 0 : i32
    %c0_i32_0 = arith.constant 0 : i32
    return %arg0, %c0_i32 : i32, i32
  }
}

</mosaic_0001>

<llo_original>
// kernel: tpu_custom_call.1
$region0: #{tpu_custom_call.1}
  #allocation0 [shape = 'u32[]', space=smem, size = 0x4, offset = 0x4, fixed_abs, tag = 'smem constant byte address 0x4 - core index']
  #allocation1 [shape = 'u32[144,128]{1,0:T(1,128)}', space=vmem, size = 0x12000, scoped, tag = 'internal scratch']
  #allocation2 [shape = 'f32[16,32]{1,0:T(8,128)}', space=vmem, size = 0x2000, scoped, tag = 'scratch operand']
  %s0 = inlined_call_operand.vmem [shape: f32[16,32], index: 0, kind: input, shape index: {}]
  %s1 = inlined_call_operand.vmem [shape: f32[32,64], index: 1, kind: input, shape index: {}]
  %s2 = inlined_call_operand.vmem [shape: f32[1,64], index: 2, kind: input, shape index: {}]
  %s3 = inlined_call_operand.vmem [shape: f32[64,32], index: 3, kind: input, shape index: {}]
  %s4 = inlined_call_operand.vmem [shape: f32[1,32], index: 4, kind: input, shape index: {}]
  %s5 = inlined_call_operand.hbm [shape: f32[16,32], index: 5, kind: output, shape index: {}]
  %s6 = sld [smem:[#allocation0]]
  $region38: #{tpu_custom_call.1} parent=0
    _
  %s8 = ssub.s32 1, %s6
  %s9 = scalar_select 0, %s8, %s6
  $region1: #{tpu_custom_call.1} parent=0
    #allocation3 [shape = 'u8[8192]{0}', space=vmem, size = 0x2000, scoped, tag = 'output window, operand 0, single buffered']
    #allocation4 [shape = 's32[1]{0}', space=sflag, size = 0x4, scoped, tag = 'scoped memory for tpu_custom_call.1']
    %10 = vsyncpa [#allocation4], 0
    // Predicated region
    $region2: #{tpu_custom_call.1} parent=1 // pred_check
      _
    $region3: #{tpu_custom_call.1} parent=1 // pred_check_branch
      %12 = sbr.rel (0) target = $region5
    $region4: #{tpu_custom_call.1} parent=1 // pred_region
      _
    $region5: #{tpu_custom_call.1} parent=1 // pred_fallthru
      _
    // Predicated region
    $region6: #{tpu_custom_call.1} parent=1 // pred_check
      _
    $region7: #{tpu_custom_call.1} parent=1 // pred_check_branch
      %14 = sbr.rel (0) target = $region9
    $region8: #{tpu_custom_call.1} parent=1 // pred_region
      _
    $region9: #{tpu_custom_call.1} parent=1 // pred_fallthru
      _
    // Predicated region
    $region10: #{tpu_custom_call.1} parent=1 // pred_check
      _
    $region11: #{tpu_custom_call.1} parent=1 // pred_check_branch
      %16 = sbr.rel (0) target = $region13
    $region12: #{tpu_custom_call.1} parent=1 // pred_region
      _
    $region13: #{tpu_custom_call.1} parent=1 // pred_fallthru
      _
    // Predicated region
    $region14: #{tpu_custom_call.1} parent=1 // pred_check
      _
    $region15: #{tpu_custom_call.1} parent=1 // pred_check_branch
      %18 = sbr.rel (0) target = $region17
    $region16: #{tpu_custom_call.1} parent=1 // pred_region
      _
    $region17: #{tpu_custom_call.1} parent=1 // pred_fallthru
      _
    // Predicated region
    $region18: #{tpu_custom_call.1} parent=1 // pred_check
      _
    $region19: #{tpu_custom_call.1} parent=1 // pred_check_branch
      %20 = sbr.rel (0) target = $region21
    $region20: #{tpu_custom_call.1} parent=1 // pred_region
      _
    $region21: #{tpu_custom_call.1} parent=1 // pred_fallthru
      _
    %p21 = scmp.eq.s32.totalorder 0, 0
    // Predicated region
    $region22: #{tpu_custom_call.1} parent=1 // pred_check
      %p22 = pneg %p21
    $region23: #{tpu_custom_call.1} parent=1 // pred_check_branch
      %24 = sbr.rel (%p22) target = $region25
    $region24: #{tpu_custom_call.1} parent=1 // pred_region
      %v25 = vld [vmem:[%s4] sm:$0x1]
      %v27 = vlaneseq
      %v28 = vshrl.u32 %v27, 7
      %v29 = vsub.s32 0, %v28
      %v30 = vrot.slane %v25, %v29
      %vm32 = vcmask 261120
      %33 = vst.msk [vmem:[#allocation2] sm:$0xff] %vm32, %v30
      %34 = vst.msk [vmem:[#allocation2 + $0x8] sm:$0xff] %vm32, %v30
    $region25: #{tpu_custom_call.1} parent=1 // pred_fallthru
      _
    %v35 = vld [vmem:[%s0] sm:$0xff]
    %v36 = vld [vmem:[%s0 + $0x8] sm:$0xff]
    %v37 = vld [vmem:[%s1] sm:$0xff]
    %v38 = vld [vmem:[%s1 + $0x8] sm:$0xff]
    %v39 = vld [vmem:[%s1 + $0x10] sm:$0xff]
    %v40 = vld [vmem:[%s1 + $0x18] sm:$0xff]
    %v41 = vld [vmem:[%s2] sm:$0x1]
    %v43 = vlaneseq
    %v44 = vshrl.u32 %v43, 7
    %v45 = vsub.s32 0, %v44
    %v46 = vrot.slane %v41, %v45
    %vm48 = vcmask 261120
    %v50 = vsel %vm48, %v35, 0
    %v53 = vsel %vm48, %v36, 0
    %55 = vmatprep.subr.mxu0 0.0
    %56 = vmatpush1.msra.mxu0 %v37
    %57 = vmatprep.subr.mxu0 0.0
    %58 = vmatpush1.msra.mxu0 %v38
    %59 = vmatprep.subr.mxu0 0.0
    %60 = vmatpush1.msra.mxu0 %v39
    %61 = vmatprep.subr.mxu0 0.0
    %62 = vmatpush1.msra.mxu0 %v40
    %63 = vmatprep.subr.mxu0 0.0
    %64 = vmatpush1.msra.mxu0 0.0
    %65 = vmatprep.subr.mxu0 0.0
    %66 = vmatpush1.msra.mxu0 0.0
    %67 = vmatprep.subr.mxu0 0.0
    %68 = vmatpush1.msra.mxu0 0.0
    %69 = vmatprep.subr.mxu0 0.0
    %70 = vmatpush1.msra.mxu0 0.0
    %71 = vmatprep.subr.mxu0 0.0
    %72 = vmatpush1.msra.mxu0 0.0
    %73 = vmatprep.subr.mxu0 0.0
    %74 = vmatpush1.msra.mxu0 0.0
    %75 = vmatprep.subr.mxu0 0.0
    %76 = vmatpush1.msra.mxu0 0.0
    %77 = vmatprep.subr.mxu0 0.0
    %78 = vmatpush1.msra.mxu0 0.0
    %79 = vmatprep.subr.mxu0 0.0
    %80 = vmatpush1.msra.mxu0 0.0
    %81 = vmatprep.subr.mxu0 0.0
    %82 = vmatpush1.msra.mxu0 0.0
    %83 = vmatprep.subr.mxu0 0.0
    %84 = vmatpush1.msra.mxu0 0.0
    %85 = vmatprep.subr.mxu0 0.0
    %86 = vmatpush1.msra.mxu0 0.0
    %87 = vmatprep.subr.mxu0 0.0
    %88 = vmatpush1.msra.mxu0 0.0
    %89 = vmatprep.subr.mxu0 0.0
    %90 = vmatpush1.msra.mxu0 0.0
    %91 = vmatprep.subr.mxu0 0.0
    %92 = vmatpush1.msra.mxu0 0.0
    %93 = vmatprep.subr.mxu0 0.0
    %94 = vmatpush1.msra.mxu0 0.0
    %95 = vmatprep.subr.mxu0 0.0
    %96 = vmatpush1.msra.mxu0 0.0
    %97 = vmatprep.subr.mxu0 0.0
    %98 = vmatpush1.msra.mxu0 0.0
    %99 = vmatprep.subr.mxu0 0.0
    %100 = vmatpush1.msra.mxu0 0.0
    %101 = vmatprep.subr.mxu0 0.0
    %102 = vmatpush1.msra.mxu0 0.0
    %103 = vmatprep.subr.mxu0 0.0
    %104 = vmatpush1.msra.mxu0 0.0
    %105 = vmatprep.subr.mxu0 0.0
    %106 = vmatpush1.msra.mxu0 0.0
    %107 = vmatprep.subr.mxu0 0.0
    %108 = vmatpush1.msra.mxu0 0.0
    %109 = vmatprep.subr.mxu0 0.0
    %110 = vmatpush1.msra.mxu0 0.0
    %111 = vmatprep.subr.mxu0 0.0
    %112 = vmatpush1.msra.mxu0 0.0
    %113 = vmatprep.subr.mxu0 0.0
    %114 = vmatpush1.msra.mxu0 0.0
    %115 = vmatprep.subr.mxu0 0.0
    %116 = vmatpush1.msra.mxu0 0.0
    %117 = vmatprep.subr.mxu0 0.0
    %118 = vmatpush1.msra.mxu0 0.0
    %119 = vmatprep.mubr.f32.mxu0 0.0
    %120 = vmatmul.mubr.f32.gmra.mrb[0].mxu0 %v50
    %v121 = vpop.f32.mrb[0].mxu0
    %v122 = vadd.f32 %v46, %v121
    %v123 = vpop.f32.mrb[0].mxu0
    %124 = vmatprep.mubr.f32.mxu0 0.0
    %125 = vmatmul.mubr.f32.gmra.mrb[0].mxu0 %v53
    %v126 = vpop.f32.mrb[0].mxu0
    %v127 = vadd.f32 %v46, %v126
    %v128 = vpop.f32.mrb[0].mxu0
    %129 = vdwg.mxu0
    %v130 = vsub.f32 0.0, %v122
    %v131 = vsub.f32 0.0, %v127
    %v132 = vmul.f32 %v130, 1.442695
    %v133 = vpow.pop %v132
    %v134 = vmul.f32 %v131, 1.442695
    %v135 = vpow.pop %v134
    %v136 = vadd.f32 %v133, 1.0
    %v137 = vadd.f32 %v135, 1.0
    %v138 = vrcp.pop %v136
    %v139 = vmul.f32 1.0, %v138
    %v140 = vrcp.pop %v137
    %v141 = vmul.f32 1.0, %v140
    %v142 = vmul.f32 %v122, %v139
    %v143 = vmul.f32 %v127, %v141
    %v144 = vld [vmem:[#allocation2] sm:$0xff]
    %v145 = vld [vmem:[#allocation2 + $0x8] sm:$0xff]
    %v146 = vld [vmem:[%s3] sm:$0xff]
    %v147 = vld [vmem:[%s3 + $0x8] sm:$0xff]
    %v148 = vld [vmem:[%s3 + $0x10] sm:$0xff]
    %v149 = vld [vmem:[%s3 + $0x18] sm:$0xff]
    %v150 = vld [vmem:[%s3 + $0x20] sm:$0xff]
    %v151 = vld [vmem:[%s3 + $0x28] sm:$0xff]
    %v152 = vld [vmem:[%s3 + $0x30] sm:$0xff]
    %v153 = vld [vmem:[%s3 + $0x38] sm:$0xff]
    %vm154 = vcmask 523264
    %v156 = vsel %vm154, %v142, 0
    %v159 = vsel %vm154, %v143, 0
    %161 = vmatprep.subr.mxu0 0.0
    %162 = vmatpush1.msra.mxu0 %v146
    %163 = vmatprep.subr.mxu0 0.0
    %164 = vmatpush1.msra.mxu0 %v147
    %165 = vmatprep.subr.mxu0 0.0
    %166 = vmatpush1.msra.mxu0 %v148
    %167 = vmatprep.subr.mxu0 0.0
    %168 = vmatpush1.msra.mxu0 %v149
    %169 = vmatprep.subr.mxu0 0.0
    %170 = vmatpush1.msra.mxu0 %v150
    %171 = vmatprep.subr.mxu0 0.0
    %172 = vmatpush1.msra.mxu0 %v151
    %173 = vmatprep.subr.mxu0 0.0
    %174 = vmatpush1.msra.mxu0 %v152
    %175 = vmatprep.subr.mxu0 0.0
    %176 = vmatpush1.msra.mxu0 %v153
    %177 = vmatprep.subr.mxu0 0.0
    %178 = vmatpush1.msra.mxu0 0.0
    %179 = vmatprep.subr.mxu0 0.0
    %180 = vmatpush1.msra.mxu0 0.0
    %181 = vmatprep.subr.mxu0 0.0
    %182 = vmatpush1.msra.mxu0 0.0
    %183 = vmatprep.subr.mxu0 0.0
    %184 = vmatpush1.msra.mxu0 0.0
    %185 = vmatprep.subr.mxu0 0.0
    %186 = vmatpush1.msra.mxu0 0.0
    %187 = vmatprep.subr.mxu0 0.0
    %188 = vmatpush1.msra.mxu0 0.0
    %189 = vmatprep.subr.mxu0 0.0
    %190 = vmatpush1.msra.mxu0 0.0
    %191 = vmatprep.subr.mxu0 0.0
    %192 = vmatpush1.msra.mxu0 0.0
    %193 = vmatprep.subr.mxu0 0.0
    %194 = vmatpush1.msra.mxu0 0.0
    %195 = vmatprep.subr.mxu0 0.0
    %196 = vmatpush1.msra.mxu0 0.0
    %197 = vmatprep.subr.mxu0 0.0
    %198 = vmatpush1.msra.mxu0 0.0
    %199 = vmatprep.subr.mxu0 0.0
    %200 = vmatpush1.msra.mxu0 0.0
    %201 = vmatprep.subr.mxu0 0.0
    %202 = vmatpush1.msra.mxu0 0.0
    %203 = vmatprep.subr.mxu0 0.0
    %204 = vmatpush1.msra.mxu0 0.0
    %205 = vmatprep.subr.mxu0 0.0
    %206 = vmatpush1.msra.mxu0 0.0
    %207 = vmatprep.subr.mxu0 0.0
    %208 = vmatpush1.msra.mxu0 0.0
    %209 = vmatprep.subr.mxu0 0.0
    %210 = vmatpush1.msra.mxu0 0.0
    %211 = vmatprep.subr.mxu0 0.0
    %212 = vmatpush1.msra.mxu0 0.0
    %213 = vmatprep.subr.mxu0 0.0
    %214 = vmatpush1.msra.mxu0 0.0
    %215 = vmatprep.subr.mxu0 0.0
    %216 = vmatpush1.msra.mxu0 0.0
    %217 = vmatprep.subr.mxu0 0.0
    %218 = vmatpush1.msra.mxu0 0.0
    %219 = vmatprep.subr.mxu0 0.0
    %220 = vmatpush1.msra.mxu0 0.0
    %221 = vmatprep.subr.mxu0 0.0
    %222 = vmatpush1.msra.mxu0 0.0
    %223 = vmatprep.subr.mxu0 0.0
    %224 = vmatpush1.msra.mxu0 0.0
    %225 = vmatprep.mubr.f32.mxu0 0.0
    %226 = vmatmul.mubr.f32.gmra.mrb[0].mxu0 %v156
    %v227 = vpop.f32.mrb[0].mxu0
    %v228 = vadd.f32 0.0, %v227
    %v229 = vpop.f32.mrb[0].mxu0
    %230 = vmatprep.mubr.f32.mxu0 0.0
    %231 = vmatmul.mubr.f32.gmra.mrb[0].mxu0 %v159
    %v232 = vpop.f32.mrb[0].mxu0
    %v233 = vadd.f32 0.0, %v232
    %v234 = vpop.f32.mrb[0].mxu0
    %235 = vdwg.mxu0
    %v236 = vadd.f32 %v144, %v228
    %v237 = vadd.f32 %v145, %v233
    %238 = vst.msk [vmem:[#allocation2] sm:$0xff] %vm48, %v236
    %239 = vst.msk [vmem:[#allocation2 + $0x8] sm:$0xff] %vm48, %v237
    // Predicated region
    $region26: #{tpu_custom_call.1} parent=1 // pred_check
      %p240 = pneg %p21
    $region27: #{tpu_custom_call.1} parent=1 // pred_check_branch
      %242 = sbr.rel (%p240) target = $region29
    $region28: #{tpu_custom_call.1} parent=1 // pred_region
      %v243 = vld [vmem:[#allocation2] sm:$0xff]
      %v244 = vld [vmem:[#allocation2 + $0x8] sm:$0xff]
      %245 = vst.msk [vmem:[#allocation3] sm:$0xff] %vm48, %v243
      %246 = vst.msk [vmem:[#allocation3 + $0x8] sm:$0xff] %vm48, %v244
    $region29: #{tpu_custom_call.1} parent=1 // pred_fallthru
      _
    // Predicated region
    $region30: #{tpu_custom_call.1} parent=1 // pred_check
      _
    $region31: #{tpu_custom_call.1} parent=1 // pred_check_branch
      %248 = sbr.rel (0) target = $region33
    $region32: #{tpu_custom_call.1} parent=1 // pred_region
      %s250 = ssub.s32 256, 256
      %251 = vsyncadd [#allocation4], %s250
      %s252 = sshll.u32 [#allocation3], 4
      %s253 = int_to_ptr.vmem [resolvable:$true] %s252
      %258 = dma.vmem_to_hbm [thread:$0]  %s253, 256, %s5, [#allocation4], 128, 128, 8
    $region33: #{tpu_custom_call.1} parent=1 // pred_fallthru
      _
    // Predicated region
    $region34: #{tpu_custom_call.1} parent=1 // pred_check
      _
    $region35: #{tpu_custom_call.1} parent=1 // pred_check_branch
      %260 = sbr.rel (0) target = $region37
    $region36: #{tpu_custom_call.1} parent=1 // pred_region
      %261 = dma.done [#allocation4], 256
    $region37: #{tpu_custom_call.1} parent=1 // pred_fallthru
      _
    %262 = vsyncpa [#allocation4], 1

</llo_original>
